<compile_context>
chip_gen: v7x
topology: tpu7x:2x2x1
jax: 0.10.0
libtpu: 0.0.40
codegen_flags: <defaults>
</compile_context>

<pallas_src>
import jax
import jax.numpy as jnp
from jax.experimental import pallas as pl
from jax.experimental.pallas import tpu as pltpu

_SUBLANE = 8


def _round_up(x: int, m: int) -> int:
    return ((x + m - 1) // m) * m


def _cdiv(a: int, b: int) -> int:
    return (a + b - 1) // b


def _make_kernel(num_feats: int):
    """Build a kernel over `num_feats` feature inputs.

    Ref layout: f_0..f_{n-1}, w_0..w_{n-1}, b1, w2, b2, o_ref
    """

    def kernel(*refs):
        feats = refs[:num_feats]
        ws = refs[num_feats:2 * num_feats]
        b1_ref = refs[2 * num_feats]
        w2_ref = refs[2 * num_feats + 1]
        b2_ref = refs[2 * num_feats + 2]
        o_ref = refs[2 * num_feats + 3]

        # Per-source projections, accumulated in f32 (MXU operands in bf16).
        h = jnp.dot(feats[0][...].astype(jnp.bfloat16), ws[0][...],
                    preferred_element_type=jnp.float32)
        for i in range(1, num_feats):
            h = h + jnp.dot(feats[i][...].astype(jnp.bfloat16), ws[i][...],
                            preferred_element_type=jnp.float32)

        # f32 epilogue: summed biases + ReLU (native on v5e/v6e/v7x VPU).
        h = h + b1_ref[...]          # (1, H) broadcasts over the batch tile
        h = jnp.maximum(h, 0.0)

        # Classifier head: bf16 MXU operands, f32 accumulation.
        logits = jnp.dot(h.astype(jnp.bfloat16), w2_ref[...],
                         preferred_element_type=jnp.float32)
        logits = logits + b2_ref[...]
        o_ref[...] = logits.astype(o_ref.dtype)

    return kernel


def prepare_fusion_params(fusion_ws, fusion_bs, clf_w, clf_b):
    """One-time parameter prep (hoisted out of the per-call forward).

    Args:
      fusion_ws: list of (D_i, H) f32 weights (x @ W layout).
      fusion_bs: list of (H,)     f32 biases.
      clf_w:     (H, 2) f32 classifier weight.
      clf_b:     (2,)   f32 classifier bias.
    Returns:
      (ws_bf16, b1, w2_bf16, b2) ready to feed the kernel.
    """
    ws_bf16 = [w.astype(jnp.bfloat16) for w in fusion_ws]
    b1 = jnp.sum(jnp.stack(fusion_bs, axis=0), axis=0)
    b1 = b1.reshape(1, -1).astype(jnp.float32)               # (1, H)
    w2_bf16 = clf_w.astype(jnp.bfloat16)                     # (H, 2)
    b2 = clf_b.reshape(1, -1).astype(jnp.float32)            # (1, 2)
    return ws_bf16, b1, w2_bf16, b2


def fusion_classifier_forward(features, ws_bf16, b1, w2, b2):
    """Fused classifier forward as a single batch-tiled Pallas kernel.

    Args:
      features: list of (B, D_i) f32 arrays (unpadded, passed straight in).
      ws_bf16, b1, w2, b2: output of prepare_fusion_params.
    Returns:
      (B, 2) f32 logits.
    """
    num_feats = len(features)
    B = features[0].shape[0]
    dims = [f.shape[1] for f in features]
    H = w2.shape[0]
    num_out = w2.shape[1]

    # Batch tile: >= 2 grid steps for B >= 16 (v7x megacore split), <= 512
    # rows/tile; tiny batches get a single sublane-aligned tile.
    if B < 16:
        TB = _round_up(max(B, 1), _SUBLANE)
    else:
        TB = min(512, _round_up(_cdiv(B, 2), _SUBLANE))
    grid = (_cdiv(B, TB),)

    in_specs = (
        # feature tiles stream over the batch grid axis (full D_i last dim)
        [pl.BlockSpec((TB, d), lambda b: (b, 0)) for d in dims]
        # weights / biases stay VMEM-resident across all batch tiles
        + [pl.BlockSpec((d, H), lambda b: (0, 0)) for d in dims]
        + [
            pl.BlockSpec((1, H), lambda b: (0, 0)),
            pl.BlockSpec((H, num_out), lambda b: (0, 0)),
            pl.BlockSpec((1, num_out), lambda b: (0, 0)),
        ]
    )

    out = pl.pallas_call(
        _make_kernel(num_feats),
        out_shape=jax.ShapeDtypeStruct((B, num_out), jnp.float32),
        grid=grid,
        in_specs=in_specs,
        out_specs=pl.BlockSpec((TB, num_out), lambda b: (b, 0)),
        compiler_params=pltpu.CompilerParams(
            dimension_semantics=("parallel",),   # megacore split on v7x
        ),
    )(*features, *ws_bf16, b1, w2, b2)

    return out


def _reference_forward(features, fusion_ws, fusion_bs, clf_w, clf_b):
    fused = None
    for f, w, b in zip(features, fusion_ws, fusion_bs):
        p = f @ w + b
        fused = p if fused is None else fused + p
    fused = jnp.maximum(fused, 0.0)
    return fused @ clf_w + clf_b


if __name__ == "__main__":
    key = jax.random.PRNGKey(0)

    batch = 8
    input_dims = [16, 32, 24]
    hidden_dim = 32

    # Deterministic parameter init (PyTorch-Linear-style uniform bounds).
    keys = jax.random.split(key, 2 * len(input_dims) + 3)
    fusion_ws, fusion_bs, features = [], [], []
    for i, dim in enumerate(input_dims):
        bound = 1.0 / jnp.sqrt(dim)
        fusion_ws.append(
            jax.random.uniform(
                keys[2 * i], (dim, hidden_dim), jnp.float32, -bound, bound
            )
        )
        fusion_bs.append(
            jax.random.uniform(
                keys[2 * i + 1], (hidden_dim,), jnp.float32, -bound, bound
            )
        )
    cbound = 1.0 / jnp.sqrt(hidden_dim)
    clf_w = jax.random.uniform(
        keys[-3], (hidden_dim, 2), jnp.float32, -cbound, cbound
    )
    clf_b = jax.random.uniform(keys[-2], (2,), jnp.float32, -cbound, cbound)

    feat_keys = jax.random.split(keys[-1], len(input_dims))
    for k, dim in zip(feat_keys, input_dims):
        features.append(jax.random.normal(k, (batch, dim), jnp.float32))

    # One-time parameter prep (hoisted out of the forward path).
    ws_bf16, b1, w2_bf16, b2 = prepare_fusion_params(
        fusion_ws, fusion_bs, clf_w, clf_b
    )

    logits = fusion_classifier_forward(features, ws_bf16, b1, w2_bf16, b2)
    jax.block_until_ready(logits)

    ref = _reference_forward(features, fusion_ws, fusion_bs, clf_w, clf_b)
    assert logits.shape == (batch, 2)
    # bf16 MXU operands (f32 accumulation) -> loosened tolerance vs f32 ref.
    assert jnp.allclose(logits, ref, atol=2e-2, rtol=2e-2)

    print("KERNEL_OK")
</pallas_src>

<mosaic_0001>
module attributes {stable_mosaic.version = 11 : i64} {
  func.func @kernel(%arg0: i32, %arg1: memref<8x16xf32, #tpu.memory_space<vmem>>, %arg2: memref<8x32xf32, #tpu.memory_space<vmem>>, %arg3: memref<8x24xf32, #tpu.memory_space<vmem>>, %arg4: memref<16x32xbf16, #tpu.memory_space<vmem>>, %arg5: memref<32x32xbf16, #tpu.memory_space<vmem>>, %arg6: memref<24x32xbf16, #tpu.memory_space<vmem>>, %arg7: memref<1x32xf32, #tpu.memory_space<vmem>>, %arg8: memref<32x2xbf16, #tpu.memory_space<vmem>>, %arg9: memref<1x2xf32, #tpu.memory_space<vmem>>, %arg10: memref<8x2xf32, #tpu.memory_space<vmem>>) attributes {dimension_semantics = [#tpu.dimension_semantics<parallel>], iteration_bounds = array<i64: 1>, scalar_prefetch = 0 : i64, scratch_operands = 0 : i64, tpu.core_type = #tpu.core_type<tc>, window_params = [{transform_indices = @transform_0, window_bounds = array<i64: 8, 16>}, {transform_indices = @transform_1, window_bounds = array<i64: 8, 32>}, {transform_indices = @transform_2, window_bounds = array<i64: 8, 24>}, {pipeline_mode = #tpu.pipeline_mode<synchronous>, transform_indices = @transform_3, window_bounds = array<i64: 16, 32>}, {pipeline_mode = #tpu.pipeline_mode<synchronous>, transform_indices = @transform_4, window_bounds = array<i64: 32, 32>}, {pipeline_mode = #tpu.pipeline_mode<synchronous>, transform_indices = @transform_5, window_bounds = array<i64: 24, 32>}, {pipeline_mode = #tpu.pipeline_mode<synchronous>, transform_indices = @transform_6, window_bounds = array<i64: 1, 32>}, {pipeline_mode = #tpu.pipeline_mode<synchronous>, transform_indices = @transform_7, window_bounds = array<i64: 32, 2>}, {pipeline_mode = #tpu.pipeline_mode<synchronous>, transform_indices = @transform_8, window_bounds = array<i64: 1, 2>}, {transform_indices = @transform_9, window_bounds = array<i64: 8, 2>}]} {
    %c0 = arith.constant 0 : index
    %c0_0 = arith.constant 0 : index
    %0 = vector.load %arg1[%c0, %c0_0] : memref<8x16xf32, #tpu.memory_space<vmem>>, vector<8x16xf32>
    %1 = arith.truncf %0 : vector<8x16xf32> to vector<8x16xbf16>
    %c0_1 = arith.constant 0 : index
    %c0_2 = arith.constant 0 : index
    %2 = vector.load %arg4[%c0_1, %c0_2] : memref<16x32xbf16, #tpu.memory_space<vmem>>, vector<16x32xbf16>
    %cst = arith.constant dense<0.000000e+00> : vector<8x32xf32>
    %3 = tpu.matmul %1, %2, %cst {dimension_numbers = #tpu.dot_dimension_numbers<[1], [0], [0], [1], [0, 0, 1, 1], [], []>} : vector<8x16xbf16>, vector<16x32xbf16>, vector<8x32xf32> -> vector<8x32xf32>
    %c0_3 = arith.constant 0 : index
    %c0_4 = arith.constant 0 : index
    %4 = vector.load %arg2[%c0_3, %c0_4] : memref<8x32xf32, #tpu.memory_space<vmem>>, vector<8x32xf32>
    %5 = arith.truncf %4 : vector<8x32xf32> to vector<8x32xbf16>
    %c0_5 = arith.constant 0 : index
    %c0_6 = arith.constant 0 : index
    %6 = vector.load %arg5[%c0_5, %c0_6] : memref<32x32xbf16, #tpu.memory_space<vmem>>, vector<32x32xbf16>
    %cst_7 = arith.constant dense<0.000000e+00> : vector<8x32xf32>
    %7 = tpu.matmul %5, %6, %cst_7 {dimension_numbers = #tpu.dot_dimension_numbers<[1], [0], [0], [1], [0, 0, 1, 1], [], []>} : vector<8x32xbf16>, vector<32x32xbf16>, vector<8x32xf32> -> vector<8x32xf32>
    %8 = arith.addf %3, %7 : vector<8x32xf32>
    %c0_8 = arith.constant 0 : index
    %c0_9 = arith.constant 0 : index
    %9 = vector.load %arg3[%c0_8, %c0_9] : memref<8x24xf32, #tpu.memory_space<vmem>>, vector<8x24xf32>
    %10 = arith.truncf %9 : vector<8x24xf32> to vector<8x24xbf16>
    %c0_10 = arith.constant 0 : index
    %c0_11 = arith.constant 0 : index
    %11 = vector.load %arg6[%c0_10, %c0_11] : memref<24x32xbf16, #tpu.memory_space<vmem>>, vector<24x32xbf16>
    %cst_12 = arith.constant dense<0.000000e+00> : vector<8x32xf32>
    %12 = tpu.matmul %10, %11, %cst_12 {dimension_numbers = #tpu.dot_dimension_numbers<[1], [0], [0], [1], [0, 0, 1, 1], [], []>} : vector<8x24xbf16>, vector<24x32xbf16>, vector<8x32xf32> -> vector<8x32xf32>
    %13 = arith.addf %8, %12 : vector<8x32xf32>
    %c0_13 = arith.constant 0 : index
    %c0_14 = arith.constant 0 : index
    %14 = vector.load %arg7[%c0_13, %c0_14] : memref<1x32xf32, #tpu.memory_space<vmem>>, vector<1x32xf32>
    %15 = vector.broadcast %14 : vector<1x32xf32> to vector<8x32xf32>
    %16 = arith.addf %13, %15 : vector<8x32xf32>
    %cst_15 = arith.constant 0.000000e+00 : f32
    %17 = vector.broadcast %cst_15 : f32 to vector<8x32xf32>
    %18 = arith.maximumf %16, %17 : vector<8x32xf32>
    %19 = arith.truncf %18 : vector<8x32xf32> to vector<8x32xbf16>
    %c0_16 = arith.constant 0 : index
    %c0_17 = arith.constant 0 : index
    %20 = vector.load %arg8[%c0_16, %c0_17] : memref<32x2xbf16, #tpu.memory_space<vmem>>, vector<32x2xbf16>
    %cst_18 = arith.constant dense<0.000000e+00> : vector<8x2xf32>
    %21 = tpu.matmul %19, %20, %cst_18 {dimension_numbers = #tpu.dot_dimension_numbers<[1], [0], [0], [1], [0, 0, 1, 1], [], []>} : vector<8x32xbf16>, vector<32x2xbf16>, vector<8x2xf32> -> vector<8x2xf32>
    %c0_19 = arith.constant 0 : index
    %c0_20 = arith.constant 0 : index
    %22 = vector.load %arg9[%c0_19, %c0_20] : memref<1x2xf32, #tpu.memory_space<vmem>>, vector<1x2xf32>
    %23 = vector.broadcast %22 : vector<1x2xf32> to vector<8x2xf32>
    %24 = arith.addf %21, %23 : vector<8x2xf32>
    %c0_21 = arith.constant 0 : index
    %c0_22 = arith.constant 0 : index
    %25 = vector.load %arg10[%c0_21, %c0_22] : memref<8x2xf32, #tpu.memory_space<vmem>>, vector<8x2xf32>
    tpu.vector_store %arg10[%c0_21, %c0_22], %24 {strides = array<i32>} : memref<8x2xf32, #tpu.memory_space<vmem>>, vector<8x2xf32>,
    return
  }
  func.func @transform_0(%arg0: i32) -> (i32, i32) {
    %c0_i32 = arith.constant 0 : i32
    %c0_i32_0 = arith.constant 0 : i32
    return %arg0, %c0_i32 : i32, i32
  }
  func.func @transform_1(%arg0: i32) -> (i32, i32) {
    %c0_i32 = arith.constant 0 : i32
    %c0_i32_0 = arith.constant 0 : i32
    return %arg0, %c0_i32 : i32, i32
  }
  func.func @transform_2(%arg0: i32) -> (i32, i32) {
    %c0_i32 = arith.constant 0 : i32
    %c0_i32_0 = arith.constant 0 : i32
    return %arg0, %c0_i32 : i32, i32
  }
  func.func @transform_3(%arg0: i32) -> (i32, i32) {
    %c0_i32 = arith.constant 0 : i32
    %c0_i32_0 = arith.constant 0 : i32
    %c0_i32_1 = arith.constant 0 : i32
    return %c0_i32, %c0_i32_0 : i32, i32
  }
  func.func @transform_4(%arg0: i32) -> (i32, i32) {
    %c0_i32 = arith.constant 0 : i32
    %c0_i32_0 = arith.constant 0 : i32
    %c0_i32_1 = arith.constant 0 : i32
    return %c0_i32, %c0_i32_0 : i32, i32
  }
  func.func @transform_5(%arg0: i32) -> (i32, i32) {
    %c0_i32 = arith.constant 0 : i32
    %c0_i32_0 = arith.constant 0 : i32
    %c0_i32_1 = arith.constant 0 : i32
    return %c0_i32, %c0_i32_0 : i32, i32
  }
  func.func @transform_6(%arg0: i32) -> (i32, i32) {
    %c0_i32 = arith.constant 0 : i32
    %c0_i32_0 = arith.constant 0 : i32
    %c0_i32_1 = arith.constant 0 : i32
    return %c0_i32, %c0_i32_0 : i32, i32
  }
  func.func @transform_7(%arg0: i32) -> (i32, i32) {
    %c0_i32 = arith.constant 0 : i32
    %c0_i32_0 = arith.constant 0 : i32
    %c0_i32_1 = arith.constant 0 : i32
    return %c0_i32, %c0_i32_0 : i32, i32
  }
  func.func @transform_8(%arg0: i32) -> (i32, i32) {
    %c0_i32 = arith.constant 0 : i32
    %c0_i32_0 = arith.constant 0 : i32
    %c0_i32_1 = arith.constant 0 : i32
    return %c0_i32, %c0_i32_0 : i32, i32
  }
  func.func @transform_9(%arg0: i32) -> (i32, i32) {
    %c0_i32 = arith.constant 0 : i32
    %c0_i32_0 = arith.constant 0 : i32
    return %arg0, %c0_i32 : i32, i32
  }
}

</mosaic_0001>

<llo_original>
// kernel: tpu_custom_call.1
$region0: #{tpu_custom_call.1}
  #allocation0 [shape = 'u32[]', space=smem, size = 0x4, offset = 0x4, fixed_abs, tag = 'smem constant byte address 0x4 - core index']
  #allocation1 [shape = 'u32[144,128]{1,0:T(1,128)}', space=vmem, size = 0x12000, scoped, tag = 'internal scratch']
  %s0 = inlined_call_operand.hbm [shape: f32[8,16], index: 0, kind: input, shape index: {}]
  %s1 = inlined_call_operand.hbm [shape: f32[8,32], index: 1, kind: input, shape index: {}]
  %s2 = inlined_call_operand.hbm [shape: f32[8,24], index: 2, kind: input, shape index: {}]
  %s3 = inlined_call_operand.hbm [shape: bf16[16,32], index: 3, kind: input, shape index: {}]
  %s4 = inlined_call_operand.vmem [shape: bf16[32,32], index: 4, kind: input, shape index: {}]
  %s5 = inlined_call_operand.vmem [shape: bf16[24,32], index: 5, kind: input, shape index: {}]
  %s6 = inlined_call_operand.vmem [shape: f32[1,32], index: 6, kind: input, shape index: {}]
  %s7 = inlined_call_operand.vmem [shape: bf16[32,2], index: 7, kind: input, shape index: {}]
  %s8 = inlined_call_operand.vmem [shape: f32[1,2], index: 8, kind: input, shape index: {}]
  %s9 = inlined_call_operand.vmem [shape: f32[8,2], index: 9, kind: output, shape index: {}]
  %s10 = sld [smem:[#allocation0]]
  $region62: #{tpu_custom_call.1} parent=0
    _
  %s12 = ssub.s32 1, %s10
  %s13 = scalar_select 0, %s12, %s10
  $region1: #{tpu_custom_call.1} parent=0
    #allocation2 [shape = 'u8[4096]{0}', space=vmem, size = 0x1000, scoped, tag = 'input window, operand 0, single buffered']
    #allocation3 [shape = 's32[1]{0}', space=sflag, size = 0x4, scoped, tag = 'scoped memory for tpu_custom_call.1']
    #allocation4 [shape = 'u8[4096]{0}', space=vmem, size = 0x1000, scoped, tag = 'input window, operand 1, single buffered']
    #allocation5 [shape = 's32[1]{0}', space=sflag, size = 0x4, scoped, tag = 'scoped memory for tpu_custom_call.1']
    #allocation6 [shape = 'u8[4096]{0}', space=vmem, size = 0x1000, scoped, tag = 'input window, operand 2, single buffered']
    #allocation7 [shape = 'u8[4096]{0}', space=vmem, size = 0x1000, scoped, tag = 'input window, operand 3, single buffered']
    #allocation8 [shape = 's32[1]{0}', space=sflag, size = 0x4, scoped, tag = 'scoped memory for tpu_custom_call.1']
    %14 = vsyncpa [#allocation3], 0
    %15 = vsyncpa [#allocation5], 0
    %16 = vsyncpa [#allocation8], 0
    // Predicated region
    $region2: #{tpu_custom_call.1} parent=1 // pred_check
      _
    $region3: #{tpu_custom_call.1} parent=1 // pred_check_branch
      %18 = sbr.rel (0) target = $region5
    $region4: #{tpu_custom_call.1} parent=1 // pred_region
      %s20 = ssub.s32 128, 128
      %21 = vsyncadd [#allocation3], %s20
      %s23 = sshll.u32 [#allocation2], 4
      %s24 = int_to_ptr.vmem [resolvable:$true] %s23
      %26 = dma.hbm_to_vmem [thread:$0]  %s0, 128, %s24, [#allocation3]
    $region5: #{tpu_custom_call.1} parent=1 // pred_fallthru
      _
    // Predicated region
    $region6: #{tpu_custom_call.1} parent=1 // pred_check
      _
    $region7: #{tpu_custom_call.1} parent=1 // pred_check_branch
      %28 = sbr.rel (0) target = $region9
    $region8: #{tpu_custom_call.1} parent=1 // pred_region
      %s30 = ssub.s32 128, 128
      %31 = vsyncadd [#allocation5], %s30
      %s33 = sshll.u32 [#allocation4], 4
      %s34 = int_to_ptr.vmem [resolvable:$true] %s33
      %36 = dma.hbm_to_vmem [thread:$0]  %s1, 128, %s34, [#allocation5]
    $region9: #{tpu_custom_call.1} parent=1 // pred_fallthru
      _
    // Predicated region
    $region10: #{tpu_custom_call.1} parent=1 // pred_check
      _
    $region11: #{tpu_custom_call.1} parent=1 // pred_check_branch
      %38 = sbr.rel (0) target = $region13
    $region12: #{tpu_custom_call.1} parent=1 // pred_region
      %s40 = ssub.s32 128, 128
      %41 = vsyncadd [#allocation5], %s40
      %s43 = sshll.u32 [#allocation6], 4
      %s44 = int_to_ptr.vmem [resolvable:$true] %s43
      %46 = dma.hbm_to_vmem [thread:$0]  %s2, 128, %s44, [#allocation5]
    $region13: #{tpu_custom_call.1} parent=1 // pred_fallthru
      _
    // Predicated region
    $region14: #{tpu_custom_call.1} parent=1 // pred_check
      _
    $region15: #{tpu_custom_call.1} parent=1 // pred_check_branch
      %48 = sbr.rel (0) target = $region17
    $region16: #{tpu_custom_call.1} parent=1 // pred_region
      %s50 = ssub.s32 128, 128
      %51 = vsyncadd [#allocation8], %s50
      %s52 = sshll.u32 [#allocation7], 4
      %s53 = int_to_ptr.vmem [resolvable:$true] %s52
      %58 = dma.hbm_to_vmem [thread:$0]  %s3, 128, %s53, [#allocation8], 64, 64, 4
    $region17: #{tpu_custom_call.1} parent=1 // pred_fallthru
      _
    // Predicated region
    $region18: #{tpu_custom_call.1} parent=1 // pred_check
      _
    $region19: #{tpu_custom_call.1} parent=1 // pred_check_branch
      %60 = sbr.rel (0) target = $region21
    $region20: #{tpu_custom_call.1} parent=1 // pred_region
      _
    $region21: #{tpu_custom_call.1} parent=1 // pred_fallthru
      _
    // Predicated region
    $region22: #{tpu_custom_call.1} parent=1 // pred_check
      _
    $region23: #{tpu_custom_call.1} parent=1 // pred_check_branch
      %62 = sbr.rel (0) target = $region25
    $region24: #{tpu_custom_call.1} parent=1 // pred_region
      _
    $region25: #{tpu_custom_call.1} parent=1 // pred_fallthru
      _
    // Predicated region
    $region26: #{tpu_custom_call.1} parent=1 // pred_check
      _
    $region27: #{tpu_custom_call.1} parent=1 // pred_check_branch
      %64 = sbr.rel (0) target = $region29
    $region28: #{tpu_custom_call.1} parent=1 // pred_region
      _
    $region29: #{tpu_custom_call.1} parent=1 // pred_fallthru
      _
    // Predicated region
    $region30: #{tpu_custom_call.1} parent=1 // pred_check
      _
    $region31: #{tpu_custom_call.1} parent=1 // pred_check_branch
      %66 = sbr.rel (0) target = $region33
    $region32: #{tpu_custom_call.1} parent=1 // pred_region
      _
    $region33: #{tpu_custom_call.1} parent=1 // pred_fallthru
      _
    // Predicated region
    $region34: #{tpu_custom_call.1} parent=1 // pred_check
      _
    $region35: #{tpu_custom_call.1} parent=1 // pred_check_branch
      %68 = sbr.rel (0) target = $region37
    $region36: #{tpu_custom_call.1} parent=1 // pred_region
      _
    $region37: #{tpu_custom_call.1} parent=1 // pred_fallthru
      _
    // Predicated region
    $region38: #{tpu_custom_call.1} parent=1 // pred_check
      _
    $region39: #{tpu_custom_call.1} parent=1 // pred_check_branch
      %70 = sbr.rel (0) target = $region41
    $region40: #{tpu_custom_call.1} parent=1 // pred_region
      %71 = dma.done [#allocation3], 128
    $region41: #{tpu_custom_call.1} parent=1 // pred_fallthru
      _
    // Predicated region
    $region42: #{tpu_custom_call.1} parent=1 // pred_check
      _
    $region43: #{tpu_custom_call.1} parent=1 // pred_check_branch
      %73 = sbr.rel (0) target = $region45
    $region44: #{tpu_custom_call.1} parent=1 // pred_region
      %74 = dma.done [#allocation5], 128
    $region45: #{tpu_custom_call.1} parent=1 // pred_fallthru
      _
    // Predicated region
    $region46: #{tpu_custom_call.1} parent=1 // pred_check
      _
    $region47: #{tpu_custom_call.1} parent=1 // pred_check_branch
      %76 = sbr.rel (0) target = $region49
    $region48: #{tpu_custom_call.1} parent=1 // pred_region
      %77 = dma.done [#allocation5], 128
    $region49: #{tpu_custom_call.1} parent=1 // pred_fallthru
      _
    // Predicated region
    $region50: #{tpu_custom_call.1} parent=1 // pred_check
      _
    $region51: #{tpu_custom_call.1} parent=1 // pred_check_branch
      %79 = sbr.rel (0) target = $region53
    $region52: #{tpu_custom_call.1} parent=1 // pred_region
      %80 = dma.done [#allocation8], 128
    $region53: #{tpu_custom_call.1} parent=1 // pred_fallthru
      _
    %v82 = vld [vmem:[#allocation2] sm:$0xff]
    %v83 = vpack.c.bf16 %v82, %v82
    %v84 = vld [vmem:[#allocation7] sm:$0xf]
    %v85 = vld [vmem:[#allocation7 + $0x4] sm:$0xf]
    %v86 = vld [vmem:[#allocation4] sm:$0xff]
    %v87 = vpack.c.bf16 %v86, %v86
    %v88 = vld [vmem:[%s4] sm:$0xf]
    %v89 = vld [vmem:[%s4 + $0x4] sm:$0xf]
    %v90 = vld [vmem:[%s4 + $0x8] sm:$0xf]
    %v91 = vld [vmem:[%s4 + $0xc] sm:$0xf]
    %v96 = vunpack.c.l.b16 %v88
    %v97 = vunpack.c.l.b16 %v89
    %v98 = vunpack.c.l.b16 %v90
    %v99 = vunpack.c.l.b16 %v91
    %v100 = vpack.c.b16 %v97, %v96
    %v101 = vpack.c.b16 %v99, %v98
    %vm104 = vcmask 261120
    %v106 = vsel %vm104, %v87, 0
    %108 = vmatprep.subr.bf16.mxu0 0
    %109 = vmatpush1.bf16.msra.mxu0 %v100
    %110 = vmatprep.subr.bf16.mxu0 0
    %111 = vmatpush1.bf16.msra.mxu0 %v101
    %112 = vmatprep.subr.bf16.mxu0 0
    %113 = vmatpush1.bf16.msra.mxu0 0
    %114 = vmatprep.subr.bf16.mxu0 0
    %115 = vmatpush1.bf16.msra.mxu0 0
    %116 = vmatprep.subr.bf16.mxu0 0
    %117 = vmatpush1.bf16.msra.mxu0 0
    %118 = vmatprep.subr.bf16.mxu0 0
    %119 = vmatpush1.bf16.msra.mxu0 0
    %120 = vmatprep.subr.bf16.mxu0 0
    %121 = vmatpush1.bf16.msra.mxu0 0
    %122 = vmatprep.subr.bf16.mxu0 0
    %123 = vmatpush1.bf16.msra.mxu0 0
    %124 = vmatprep.subr.bf16.mxu0 0
    %125 = vmatpush1.bf16.msra.mxu0 0
    %126 = vmatprep.subr.bf16.mxu0 0
    %127 = vmatpush1.bf16.msra.mxu0 0
    %128 = vmatprep.subr.bf16.mxu0 0
    %129 = vmatpush1.bf16.msra.mxu0 0
    %130 = vmatprep.subr.bf16.mxu0 0
    %131 = vmatpush1.bf16.msra.mxu0 0
    %132 = vmatprep.subr.bf16.mxu0 0
    %133 = vmatpush1.bf16.msra.mxu0 0
    %134 = vmatprep.subr.bf16.mxu0 0
    %135 = vmatpush1.bf16.msra.mxu0 0
    %136 = vmatprep.subr.bf16.mxu0 0
    %137 = vmatpush1.bf16.msra.mxu0 0
    %138 = vmatprep.subr.bf16.mxu0 0
    %139 = vmatpush1.bf16.msra.mxu0 0
    %140 = vmatprep.mubr.bf16.mxu0 0
    %141 = vmatmul.mubr.bf16.gmra.mrb[0].mxu0 %v106
    %v142 = vpop.f32.mrb[0].mxu0
    %v143 = vadd.f32 0.0, %v142
    %v144 = vpop.f32.mrb[0].mxu0
    %v145 = vpop.f32.mrb[0].mxu0
    %v146 = vpop.f32.mrb[0].mxu0
    %147 = vdwg.mxu0
    %v150 = vunpack.c.l.b16 %v84
    %v151 = vunpack.c.l.b16 %v85
    %v152 = vpack.c.b16 %v151, %v150
    %vm154 = vcmask 130048
    %v156 = vsel %vm154, %v83, 0
    %158 = vmatprep.subr.bf16.mxu0 0
    %159 = vmatpush1.bf16.msra.mxu0 %v152
    %160 = vmatprep.subr.bf16.mxu0 0
    %161 = vmatpush1.bf16.msra.mxu0 0
    %162 = vmatprep.subr.bf16.mxu0 0
    %163 = vmatpush1.bf16.msra.mxu0 0
    %164 = vmatprep.subr.bf16.mxu0 0
    %165 = vmatpush1.bf16.msra.mxu0 0
    %166 = vmatprep.subr.bf16.mxu0 0
    %167 = vmatpush1.bf16.msra.mxu0 0
    %168 = vmatprep.subr.bf16.mxu0 0
    %169 = vmatpush1.bf16.msra.mxu0 0
    %170 = vmatprep.subr.bf16.mxu0 0
    %171 = vmatpush1.bf16.msra.mxu0 0
    %172 = vmatprep.subr.bf16.mxu0 0
    %173 = vmatpush1.bf16.msra.mxu0 0
    %174 = vmatprep.subr.bf16.mxu0 0
    %175 = vmatpush1.bf16.msra.mxu0 0
    %176 = vmatprep.subr.bf16.mxu0 0
    %177 = vmatpush1.bf16.msra.mxu0 0
    %178 = vmatprep.subr.bf16.mxu0 0
    %179 = vmatpush1.bf16.msra.mxu0 0
    %180 = vmatprep.subr.bf16.mxu0 0
    %181 = vmatpush1.bf16.msra.mxu0 0
    %182 = vmatprep.subr.bf16.mxu0 0
    %183 = vmatpush1.bf16.msra.mxu0 0
    %184 = vmatprep.subr.bf16.mxu0 0
    %185 = vmatpush1.bf16.msra.mxu0 0
    %186 = vmatprep.subr.bf16.mxu0 0
    %187 = vmatpush1.bf16.msra.mxu0 0
    %188 = vmatprep.subr.bf16.mxu0 0
    %189 = vmatpush1.bf16.msra.mxu0 0
    %190 = vmatprep.mubr.bf16.mxu0 0
    %191 = vmatmul.mubr.bf16.gmra.mrb[0].mxu0 %v156
    %v192 = vpop.f32.mrb[0].mxu0
    %v193 = vadd.f32 %v143, %v192
    %v194 = vpop.f32.mrb[0].mxu0
    %v195 = vpop.f32.mrb[0].mxu0
    %v196 = vpop.f32.mrb[0].mxu0
    %197 = vdwg.mxu0
    %v198 = vld [vmem:[#allocation6] sm:$0xff]
    %v199 = vpack.c.bf16 %v198, %v198
    %v200 = vld [vmem:[%s5] sm:$0xf]
    %v201 = vld [vmem:[%s5 + $0x4] sm:$0xf]
    %v202 = vld [vmem:[%s5 + $0x8] sm:$0xf]
    %v206 = vunpack.c.l.b16 %v200
    %v207 = vunpack.c.l.b16 %v201
    %v208 = vunpack.c.l.b16 %v202
    %v209 = vpack.c.b16 %v207, %v206
    %v210 = vpack.c.b16 %v208, %v208
    %vm212 = vcmask 195584
    %v214 = vsel %vm212, %v199, 0
    %vm216 = vcmask 1043456
    %v218 = vsel %vm216, %v210, 0
    %220 = vmatprep.subr.bf16.mxu0 0
    %221 = vmatpush1.bf16.msra.mxu0 %v209
    %222 = vmatprep.subr.bf16.mxu0 0
    %223 = vmatpush1.bf16.msra.mxu0 %v218
    %224 = vmatprep.subr.bf16.mxu0 0
    %225 = vmatpush1.bf16.msra.mxu0 0
    %226 = vmatprep.subr.bf16.mxu0 0
    %227 = vmatpush1.bf16.msra.mxu0 0
    %228 = vmatprep.subr.bf16.mxu0 0
    %229 = vmatpush1.bf16.msra.mxu0 0
    %230 = vmatprep.subr.bf16.mxu0 0
    %231 = vmatpush1.bf16.msra.mxu0 0
    %232 = vmatprep.subr.bf16.mxu0 0
    %233 = vmatpush1.bf16.msra.mxu0 0
    %234 = vmatprep.subr.bf16.mxu0 0
    %235 = vmatpush1.bf16.msra.mxu0 0
    %236 = vmatprep.subr.bf16.mxu0 0
    %237 = vmatpush1.bf16.msra.mxu0 0
    %238 = vmatprep.subr.bf16.mxu0 0
    %239 = vmatpush1.bf16.msra.mxu0 0
    %240 = vmatprep.subr.bf16.mxu0 0
    %241 = vmatpush1.bf16.msra.mxu0 0
    %242 = vmatprep.subr.bf16.mxu0 0
    %243 = vmatpush1.bf16.msra.mxu0 0
    %244 = vmatprep.subr.bf16.mxu0 0
    %245 = vmatpush1.bf16.msra.mxu0 0
    %246 = vmatprep.subr.bf16.mxu0 0
    %247 = vmatpush1.bf16.msra.mxu0 0
    %248 = vmatprep.subr.bf16.mxu0 0
    %249 = vmatpush1.bf16.msra.mxu0 0
    %250 = vmatprep.subr.bf16.mxu0 0
    %251 = vmatpush1.bf16.msra.mxu0 0
    %252 = vmatprep.mubr.bf16.mxu0 0
    %253 = vmatmul.mubr.bf16.gmra.mrb[0].mxu0 %v214
    %v254 = vpop.f32.mrb[0].mxu0
    %v255 = vadd.f32 0.0, %v254
    %v256 = vpop.f32.mrb[0].mxu0
    %v257 = vpop.f32.mrb[0].mxu0
    %v258 = vpop.f32.mrb[0].mxu0
    %259 = vdwg.mxu0
    %v260 = vadd.f32 %v193, %v255
    %v261 = vld [vmem:[%s6] sm:$0x1]
    %v263 = vlaneseq
    %v264 = vshrl.u32 %v263, 7
    %v265 = vsub.s32 0, %v264
    %v266 = vrot.slane %v261, %v265
    %v268 = vadd.f32 %v260, %v266
    %v269 = vmax.f32 %v268, 0.0
    %v270 = vpack.c.bf16 %v269, %v269
    %v271 = vld [vmem:[%s7] sm:$0xf]
    %v272 = vld [vmem:[%s7 + $0x4] sm:$0xf]
    %v273 = vld [vmem:[%s7 + $0x8] sm:$0xf]
    %v274 = vld [vmem:[%s7 + $0xc] sm:$0xf]
    %v275 = vld [vmem:[%s8] sm:$0x1]
    %v277 = vlaneseq
    %v278 = vshrl.u32 %v277, 7
    %v279 = vsub.s32 0, %v278
    %v280 = vrot.slane %v275, %v279
    %v286 = vunpack.c.l.b16 %v271
    %v287 = vunpack.c.l.b16 %v272
    %v288 = vunpack.c.l.b16 %v273
    %v289 = vunpack.c.l.b16 %v274
    %v290 = vpack.c.b16 %v287, %v286
    %v291 = vpack.c.b16 %v289, %v288
    %v295 = vsel %vm104, %v270, 0
    %297 = vmatprep.subr.bf16.mxu0 0
    %298 = vmatpush1.bf16.msra.mxu0 %v290
    %299 = vmatprep.subr.bf16.mxu0 0
    %300 = vmatpush1.bf16.msra.mxu0 %v291
    %301 = vmatprep.subr.bf16.mxu0 0
    %302 = vmatpush1.bf16.msra.mxu0 0
    %303 = vmatprep.subr.bf16.mxu0 0
    %304 = vmatpush1.bf16.msra.mxu0 0
    %305 = vmatprep.subr.bf16.mxu0 0
    %306 = vmatpush1.bf16.msra.mxu0 0
    %307 = vmatprep.subr.bf16.mxu0 0
    %308 = vmatpush1.bf16.msra.mxu0 0
    %309 = vmatprep.subr.bf16.mxu0 0
    %310 = vmatpush1.bf16.msra.mxu0 0
    %311 = vmatprep.subr.bf16.mxu0 0
    %312 = vmatpush1.bf16.msra.mxu0 0
    %313 = vmatprep.subr.bf16.mxu0 0
    %314 = vmatpush1.bf16.msra.mxu0 0
    %315 = vmatprep.subr.bf16.mxu0 0
    %316 = vmatpush1.bf16.msra.mxu0 0
    %317 = vmatprep.subr.bf16.mxu0 0
    %318 = vmatpush1.bf16.msra.mxu0 0
    %319 = vmatprep.subr.bf16.mxu0 0
    %320 = vmatpush1.bf16.msra.mxu0 0
    %321 = vmatprep.subr.bf16.mxu0 0
    %322 = vmatpush1.bf16.msra.mxu0 0
    %323 = vmatprep.subr.bf16.mxu0 0
    %324 = vmatpush1.bf16.msra.mxu0 0
    %325 = vmatprep.subr.bf16.mxu0 0
    %326 = vmatpush1.bf16.msra.mxu0 0
    %327 = vmatprep.subr.bf16.mxu0 0
    %328 = vmatpush1.bf16.msra.mxu0 0
    %329 = vmatprep.mubr.bf16.mxu0 0
    %330 = vmatmul.mubr.bf16.gmra.mrb[0].mxu0 %v295
    %v331 = vpop.f32.mrb[0].mxu0
    %v332 = vadd.f32 %v280, %v331
    %v333 = vpop.f32.mrb[0].mxu0
    %v334 = vpop.f32.mrb[0].mxu0
    %v335 = vpop.f32.mrb[0].mxu0
    %336 = vdwg.mxu0
    %vm337 = vcmask 15360
    %338 = vst.msk [vmem:[%s9] sm:$0xff] %vm337, %v332
    // Predicated region
    $region54: #{tpu_custom_call.1} parent=1 // pred_check
      _
    $region55: #{tpu_custom_call.1} parent=1 // pred_check_branch
      %340 = sbr.rel (0) target = $region57
    $region56: #{tpu_custom_call.1} parent=1 // pred_region
      _
    $region57: #{tpu_custom_call.1} parent=1 // pred_fallthru
      _
    // Predicated region
    $region58: #{tpu_custom_call.1} parent=1 // pred_check
      _
    $region59: #{tpu_custom_call.1} parent=1 // pred_check_branch
      %342 = sbr.rel (0) target = $region61
    $region60: #{tpu_custom_call.1} parent=1 // pred_region
      _
    $region61: #{tpu_custom_call.1} parent=1 // pred_fallthru
      _
    %343 = vsyncpa [#allocation3], 1
    %344 = vsyncpa [#allocation5], 1
    %345 = vsyncpa [#allocation8], 1

</llo_original>
